<compile_context>
chip_gen: v5e
topology: v5e:2x2
jax: 0.10.0
libtpu: 0.0.40
codegen_flags: <defaults>
</compile_context>

<pallas_src>
import functools

import jax
import jax.numpy as jnp
from jax import lax
from jax.experimental import pallas as pl
from jax.experimental.pallas import tpu as pltpu


def _consistent_loss_kernel(x_ref, y_ref, acc_ref, *, n_rows, tile_n, need_mask):
    i = pl.program_id(0)

    @pl.when(i == 0)
    def _():
        acc_ref[...] = jnp.zeros_like(acc_ref)

    x = x_ref[...].astype(jnp.float32)                    # [tn, V]
    y = y_ref[...].astype(jnp.float32)                    # [tn, V]
    tn, v = x.shape

    # numerically-stable softmax along the vocab (lane) axis
    ex = jnp.exp(x - jnp.max(x, axis=-1, keepdims=True))
    p = ex * (1.0 / jnp.sum(ex, axis=-1, keepdims=True))
    ey = jnp.exp(y - jnp.max(y, axis=-1, keepdims=True))
    q = ey * (1.0 / jnp.sum(ey, axis=-1, keepdims=True))

    d = p - q
    sq = d * d                                            # [tn, V]

    if need_mask:
        # zero contributions of padded rows in the (possibly partial) last block
        row = lax.broadcasted_iota(jnp.int32, (tn, 1), 0) + i * tile_n
        sq = jnp.where(row < n_rows, sq, 0.0)

    # Fold rows eight-at-a-time into the lane-dense accumulator: pure VALU vreg
    # adds, no cross-lane/sublane reduce inside the grid loop.
    acc_ref[...] += jnp.sum(sq.reshape(tn // 8, 8, v), axis=0)


def _round_up(a, b):
    return ((a + b - 1) // b) * b


def _pick_tile_n(n_rows, v, itemsize):
    # byte budget for the double-buffered copies of BOTH inputs
    input_budget = 12 * 1024 * 1024
    bytes_per_row = 2 * 2 * v * itemsize          # 2 inputs x 2 pipeline buffers
    t = max(8, input_budget // bytes_per_row)
    t = min(t, 1024, _round_up(n_rows, 8))
    return max(8, (t // 8) * 8)


@jax.jit
def consistent_loss(outputs, outputs_ema):
    """outputs, outputs_ema: [B, max_len-1, V] float. Returns scalar f32 loss."""
    B, T, V = outputs.shape
    N = B * T
    x = outputs.reshape(N, V)
    y = outputs_ema.reshape(N, V)

    tile_n = _pick_tile_n(N, V, jnp.dtype(outputs.dtype).itemsize)
    grid = (pl.cdiv(N, tile_n),)
    need_mask = (N % tile_n) != 0

    kernel = functools.partial(_consistent_loss_kernel,
                               n_rows=N, tile_n=tile_n, need_mask=need_mask)

    acc = pl.pallas_call(
        kernel,
        out_shape=jax.ShapeDtypeStruct((8, V), jnp.float32),
        grid_spec=pltpu.PrefetchScalarGridSpec(
            num_scalar_prefetch=0,
            grid=grid,
            in_specs=[pl.BlockSpec((tile_n, V), lambda i: (i, 0)),
                      pl.BlockSpec((tile_n, V), lambda i: (i, 0))],
            out_specs=pl.BlockSpec((8, V), lambda i: (0, 0)),
        ),
        compiler_params=pltpu.CompilerParams(
            dimension_semantics=("arbitrary",),   # accumulator resident across grid
            vmem_limit_bytes=48 * 1024 * 1024),
    )(x, y)

    return jnp.sum(acc) / jnp.float32(B * V)


def _reference(outputs, outputs_ema):
    """Pure-JAX reference mirroring the PyTorch module."""
    B, T, V = outputs.shape
    p = jax.nn.softmax(outputs.astype(jnp.float32), axis=-1)
    q = jax.nn.softmax(outputs_ema.astype(jnp.float32), axis=-1)
    return jnp.sum((p - q) ** 2) / (B * V)


if __name__ == "__main__":
    key = jax.random.PRNGKey(0)
    k1, k2 = jax.random.split(key)

    B, max_len, V = 4, 9, 128                   # N = B*(max_len-1) = 32 rows
    outputs = jax.random.normal(k1, (B, max_len - 1, V), dtype=jnp.float32)
    outputs_ema = jax.random.normal(k2, (B, max_len - 1, V), dtype=jnp.float32)

    loss = consistent_loss(outputs, outputs_ema)
    jax.block_until_ready(loss)

    ref = _reference(outputs, outputs_ema)
    assert jnp.allclose(loss, ref, rtol=1e-5, atol=1e-6), (loss, ref)
    print("KERNEL_OK")
</pallas_src>

<mosaic_0001>
module attributes {stable_mosaic.version = 11 : i64} {
  func.func @_consistent_loss_kernel(%arg0: i32, %arg1: memref<32x128xf32, #tpu.memory_space<vmem>>, %arg2: memref<32x128xf32, #tpu.memory_space<vmem>>, %arg3: memref<8x128xf32, #tpu.memory_space<vmem>>) attributes {dimension_semantics = [#tpu.dimension_semantics<arbitrary>], iteration_bounds = array<i64: 1>, scalar_prefetch = 0 : i64, scratch_operands = 0 : i64, tpu.core_type = #tpu.core_type<tc>, window_params = [{transform_indices = @transform_0, window_bounds = array<i64: 32, 128>}, {transform_indices = @transform_1, window_bounds = array<i64: 32, 128>}, {pipeline_mode = #tpu.pipeline_mode<synchronous>, transform_indices = @transform_2, window_bounds = array<i64: 8, 128>}]} {
    %c0_i32 = arith.constant 0 : i32
    %0 = arith.cmpi eq, %arg0, %c0_i32 : i32
    %1 = arith.extui %0 : i1 to i32
    %c0_i32_0 = arith.constant 0 : i32
    %2 = arith.cmpi ne, %1, %c0_i32_0 : i32
    scf.if %2 {
      %cst_14 = arith.constant 0.000000e+00 : f32
      %34 = vector.broadcast %cst_14 : f32 to vector<8x128xf32>
      %c0_15 = arith.constant 0 : index
      %c0_16 = arith.constant 0 : index
      %35 = vector.load %arg3[%c0_15, %c0_16] : memref<8x128xf32, #tpu.memory_space<vmem>>, vector<8x128xf32>
      tpu.vector_store %arg3[%c0_15, %c0_16], %34 {strides = array<i32>} : memref<8x128xf32, #tpu.memory_space<vmem>>, vector<8x128xf32>,
    } else {
    }
    %c0 = arith.constant 0 : index
    %c0_1 = arith.constant 0 : index
    %3 = vector.load %arg1[%c0, %c0_1] : memref<32x128xf32, #tpu.memory_space<vmem>>, vector<32x128xf32>
    %c0_2 = arith.constant 0 : index
    %c0_3 = arith.constant 0 : index
    %4 = vector.load %arg2[%c0_2, %c0_3] : memref<32x128xf32, #tpu.memory_space<vmem>>, vector<32x128xf32>
    %cst = arith.constant dense<0xFF800000> : vector<32xf32>
    %5 = vector.multi_reduction <maximumf>, %3, %cst [1] : vector<32x128xf32> to vector<32xf32>
    %6 = vector.shape_cast %5 : vector<32xf32> to vector<32x1xf32>
    %7 = vector.broadcast %6 : vector<32x1xf32> to vector<32x128xf32>
    %8 = arith.subf %3, %7 : vector<32x128xf32>
    %9 = math.exp %8 : vector<32x128xf32>
    %cst_4 = arith.constant dense<0.000000e+00> : vector<32xf32>
    %10 = vector.multi_reduction <add>, %9, %cst_4 [1] : vector<32x128xf32> to vector<32xf32>
    %11 = vector.shape_cast %10 : vector<32xf32> to vector<32x1xf32>
    %cst_5 = arith.constant 1.000000e+00 : f32
    %12 = vector.broadcast %cst_5 : f32 to vector<32x1xf32>
    %13 = arith.divf %12, %11 : vector<32x1xf32>
    %14 = vector.broadcast %13 : vector<32x1xf32> to vector<32x128xf32>
    %15 = arith.mulf %9, %14 : vector<32x128xf32>
    %cst_6 = arith.constant dense<0xFF800000> : vector<32xf32>
    %16 = vector.multi_reduction <maximumf>, %4, %cst_6 [1] : vector<32x128xf32> to vector<32xf32>
    %17 = vector.shape_cast %16 : vector<32xf32> to vector<32x1xf32>
    %18 = vector.broadcast %17 : vector<32x1xf32> to vector<32x128xf32>
    %19 = arith.subf %4, %18 : vector<32x128xf32>
    %20 = math.exp %19 : vector<32x128xf32>
    %cst_7 = arith.constant dense<0.000000e+00> : vector<32xf32>
    %21 = vector.multi_reduction <add>, %20, %cst_7 [1] : vector<32x128xf32> to vector<32xf32>
    %22 = vector.shape_cast %21 : vector<32xf32> to vector<32x1xf32>
    %cst_8 = arith.constant 1.000000e+00 : f32
    %23 = vector.broadcast %cst_8 : f32 to vector<32x1xf32>
    %24 = arith.divf %23, %22 : vector<32x1xf32>
    %25 = vector.broadcast %24 : vector<32x1xf32> to vector<32x128xf32>
    %26 = arith.mulf %20, %25 : vector<32x128xf32>
    %27 = arith.subf %15, %26 : vector<32x128xf32>
    %28 = arith.mulf %27, %27 : vector<32x128xf32>
    %c0_9 = arith.constant 0 : index
    %c0_10 = arith.constant 0 : index
    %29 = vector.load %arg3[%c0_9, %c0_10] : memref<8x128xf32, #tpu.memory_space<vmem>>, vector<8x128xf32>
    %30 = vector.shape_cast %28 : vector<32x128xf32> to vector<4x8x128xf32>
    %cst_11 = arith.constant dense<0.000000e+00> : vector<8x128xf32>
    %31 = vector.multi_reduction <add>, %30, %cst_11 [0] : vector<4x8x128xf32> to vector<8x128xf32>
    %32 = arith.addf %29, %31 : vector<8x128xf32>
    %c0_12 = arith.constant 0 : index
    %c0_13 = arith.constant 0 : index
    %33 = vector.load %arg3[%c0_12, %c0_13] : memref<8x128xf32, #tpu.memory_space<vmem>>, vector<8x128xf32>
    tpu.vector_store %arg3[%c0_12, %c0_13], %32 {strides = array<i32>} : memref<8x128xf32, #tpu.memory_space<vmem>>, vector<8x128xf32>,
    return
  }
  func.func @transform_0(%arg0: i32) -> (i32, i32) {
    %c0_i32 = arith.constant 0 : i32
    %c0_i32_0 = arith.constant 0 : i32
    return %arg0, %c0_i32 : i32, i32
  }
  func.func @transform_1(%arg0: i32) -> (i32, i32) {
    %c0_i32 = arith.constant 0 : i32
    %c0_i32_0 = arith.constant 0 : i32
    return %arg0, %c0_i32 : i32, i32
  }
  func.func @transform_2(%arg0: i32) -> (i32, i32) {
    %c0_i32 = arith.constant 0 : i32
    %c0_i32_0 = arith.constant 0 : i32
    %c0_i32_1 = arith.constant 0 : i32
    return %c0_i32, %c0_i32_0 : i32, i32
  }
}

</mosaic_0001>

<llo_original>
// kernel: consistent_loss.1
$region0: #{consistent_loss.1}
  #allocation0 [shape = 'u32[]', space=smem, size = 0x4, offset = 0x4, fixed_abs, tag = 'smem constant byte address 0x4 - core index']
  #allocation1 [shape = 'u32[72,128]{1,0:T(1,128)}', space=vmem, size = 0x9000, scoped, tag = 'internal scratch']
  %s0 = inlined_call_operand.hbm [shape: f32[32,128], index: 0, kind: input, shape index: {}]
  %s1 = inlined_call_operand.hbm [shape: f32[32,128], index: 1, kind: input, shape index: {}]
  %s2 = inlined_call_operand.vmem [shape: f32[8,128], index: 2, kind: output, shape index: {}]
  %s3 = sld [smem:[#allocation0]]
  $region30: #{consistent_loss.1} parent=0
    _
  %s5 = ssub.s32 1, %s3
  %s6 = scalar_select 0, %s5, %s3
  $region1: #{consistent_loss.1} parent=0
    #allocation2 [shape = 'u8[16384]{0}', space=vmem, size = 0x4000, scoped, tag = 'input window, operand 0, single buffered']
    #allocation3 [shape = 's32[1]{0}', space=sflag, size = 0x4, scoped, tag = 'scoped memory for consistent_loss.1']
    #allocation4 [shape = 'u8[16384]{0}', space=vmem, size = 0x4000, scoped, tag = 'input window, operand 1, single buffered']
    #allocation5 [shape = 's32[1]{0}', space=sflag, size = 0x4, scoped, tag = 'scoped memory for consistent_loss.1']
    %7 = vsyncpa [#allocation3], 0
    %8 = vsyncpa [#allocation5], 0
    // Predicated region
    $region2: #{consistent_loss.1} parent=1 // pred_check
      _
    $region3: #{consistent_loss.1} parent=1 // pred_check_branch
      %10 = sbr.rel (0) target = $region5
    $region4: #{consistent_loss.1} parent=1 // pred_region
      %12 = vsyncadd [#allocation3], 0
      %s13 = sshll.u32 %s0, 4
      %s14 = int_to_ptr.hbm [resolvable:$true] %s13
      %s15 = sshll.u32 [#allocation2], 4
      %s16 = int_to_ptr.vmem [resolvable:$true] %s15
      %21 = dma.hbm_to_vmem [thread:$0]  %s14, 512, %s16, [#allocation3], 128, 128, 8
    $region5: #{consistent_loss.1} parent=1 // pred_fallthru
      _
    // Predicated region
    $region6: #{consistent_loss.1} parent=1 // pred_check
      _
    $region7: #{consistent_loss.1} parent=1 // pred_check_branch
      %23 = sbr.rel (0) target = $region9
    $region8: #{consistent_loss.1} parent=1 // pred_region
      %25 = vsyncadd [#allocation5], 0
      %s26 = sshll.u32 %s1, 4
      %s27 = int_to_ptr.hbm [resolvable:$true] %s26
      %s28 = sshll.u32 [#allocation4], 4
      %s29 = int_to_ptr.vmem [resolvable:$true] %s28
      %34 = dma.hbm_to_vmem [thread:$0]  %s27, 512, %s29, [#allocation5], 128, 128, 8
    $region9: #{consistent_loss.1} parent=1 // pred_fallthru
      _
    // Predicated region
    $region10: #{consistent_loss.1} parent=1 // pred_check
      _
    $region11: #{consistent_loss.1} parent=1 // pred_check_branch
      %36 = sbr.rel (0) target = $region13
    $region12: #{consistent_loss.1} parent=1 // pred_region
      %38 = dma.done [#allocation3], 512
    $region13: #{consistent_loss.1} parent=1 // pred_fallthru
      _
    // Predicated region
    $region14: #{consistent_loss.1} parent=1 // pred_check
      _
    $region15: #{consistent_loss.1} parent=1 // pred_check_branch
      %40 = sbr.rel (0) target = $region17
    $region16: #{consistent_loss.1} parent=1 // pred_region
      %42 = dma.done [#allocation5], 512
    $region17: #{consistent_loss.1} parent=1 // pred_fallthru
      _
    %p43 = scmp.eq.s32.totalorder 0, 0
    // Predicated region
    $region18: #{consistent_loss.1} parent=1 // pred_check
      %p44 = pneg %p43
    $region19: #{consistent_loss.1} parent=1 // pred_check_branch
      %46 = sbr.rel (%p44) target = $region21
    $region20: #{consistent_loss.1} parent=1 // pred_region
      %47 = vst [vmem:[%s2] sm:$0xff] 0.0
    $region21: #{consistent_loss.1} parent=1 // pred_fallthru
      _
    %v48 = vld [vmem:[#allocation2] sm:$0xff]
    %v49 = vld [vmem:[#allocation2 + $0x8] sm:$0xff]
    %v50 = vld [vmem:[#allocation2 + $0x10] sm:$0xff]
    %v51 = vld [vmem:[#allocation2 + $0x18] sm:$0xff]
    %v52 = vld [vmem:[#allocation4] sm:$0xff]
    %v53 = vld [vmem:[#allocation4 + $0x8] sm:$0xff]
    %v54 = vld [vmem:[#allocation4 + $0x10] sm:$0xff]
    %v55 = vld [vmem:[#allocation4 + $0x18] sm:$0xff]
    %56 = vmax.xlane.f32.xlu0 %v48
    %v57 = vpop.xlane.xlu0 %56
    %58 = vmax.xlane.f32.xlu0 %v49
    %v59 = vpop.xlane.xlu0 %58
    %60 = vmax.xlane.f32.xlu0 %v50
    %v61 = vpop.xlane.xlu0 %60
    %62 = vmax.xlane.f32.xlu0 %v51
    %v63 = vpop.xlane.xlu0 %62
    %v64 = vsub.f32 %v48, %v57
    %v65 = vsub.f32 %v49, %v59
    %v66 = vsub.f32 %v50, %v61
    %v67 = vsub.f32 %v51, %v63
    %v68 = vmul.f32 %v64, 1.442695
    %v69 = vpow.pop %v68
    %v70 = vmul.f32 %v65, 1.442695
    %v71 = vpow.pop %v70
    %v72 = vmul.f32 %v66, 1.442695
    %v73 = vpow.pop %v72
    %v74 = vmul.f32 %v67, 1.442695
    %v75 = vpow.pop %v74
    %76 = vadd.xlane.f32.xlu0 %v69
    %v77 = vpop.xlane.xlu0 %76
    %78 = vadd.xlane.f32.xlu0 %v71
    %v79 = vpop.xlane.xlu0 %78
    %80 = vadd.xlane.f32.xlu0 %v73
    %v81 = vpop.xlane.xlu0 %80
    %82 = vadd.xlane.f32.xlu0 %v75
    %v83 = vpop.xlane.xlu0 %82
    %v84 = vrcp.pop %v77
    %v85 = vmul.f32 %v77, %v84
    %v86 = vsub.f32 1.0, %v85
    %v87 = vmul.f32 %v84, %v86
    %v88 = vadd.f32 %v84, %v87
    %vm89 = vweird.f32 %v77
    %vm90 = vweird.f32 %v84
    %vm91 = vmor %vm89, %vm90
    %v92 = vsel %vm91, %v84, %v88
    %v93 = vand.u32 2147483647, %v77
    %vm94 = vcmp.eq.f32.partialorder %v93, 8.507059e+37
    %v95 = vand.u32 %v77, 2147483648
    %v96 = vor.u32 1.1754944e-38, %v95
    %v97 = vsel %vm94, %v96, %v92
    %v98 = vmul.f32 1.0, %v97
    %v99 = vrcp.pop %v79
    %v100 = vmul.f32 %v79, %v99
    %v101 = vsub.f32 1.0, %v100
    %v102 = vmul.f32 %v99, %v101
    %v103 = vadd.f32 %v99, %v102
    %vm104 = vweird.f32 %v79
    %vm105 = vweird.f32 %v99
    %vm106 = vmor %vm104, %vm105
    %v107 = vsel %vm106, %v99, %v103
    %v108 = vand.u32 2147483647, %v79
    %vm109 = vcmp.eq.f32.partialorder %v108, 8.507059e+37
    %v110 = vand.u32 %v79, 2147483648
    %v111 = vor.u32 1.1754944e-38, %v110
    %v112 = vsel %vm109, %v111, %v107
    %v113 = vmul.f32 1.0, %v112
    %v114 = vrcp.pop %v81
    %v115 = vmul.f32 %v81, %v114
    %v116 = vsub.f32 1.0, %v115
    %v117 = vmul.f32 %v114, %v116
    %v118 = vadd.f32 %v114, %v117
    %vm119 = vweird.f32 %v81
    %vm120 = vweird.f32 %v114
    %vm121 = vmor %vm119, %vm120
    %v122 = vsel %vm121, %v114, %v118
    %v123 = vand.u32 2147483647, %v81
    %vm124 = vcmp.eq.f32.partialorder %v123, 8.507059e+37
    %v125 = vand.u32 %v81, 2147483648
    %v126 = vor.u32 1.1754944e-38, %v125
    %v127 = vsel %vm124, %v126, %v122
    %v128 = vmul.f32 1.0, %v127
    %v129 = vrcp.pop %v83
    %v130 = vmul.f32 %v83, %v129
    %v131 = vsub.f32 1.0, %v130
    %v132 = vmul.f32 %v129, %v131
    %v133 = vadd.f32 %v129, %v132
    %vm134 = vweird.f32 %v83
    %vm135 = vweird.f32 %v129
    %vm136 = vmor %vm134, %vm135
    %v137 = vsel %vm136, %v129, %v133
    %v138 = vand.u32 2147483647, %v83
    %vm139 = vcmp.eq.f32.partialorder %v138, 8.507059e+37
    %v140 = vand.u32 %v83, 2147483648
    %v141 = vor.u32 1.1754944e-38, %v140
    %v142 = vsel %vm139, %v141, %v137
    %v143 = vmul.f32 1.0, %v142
    %v144 = vmul.f32 %v69, %v98
    %v145 = vmul.f32 %v71, %v113
    %v146 = vmul.f32 %v73, %v128
    %v147 = vmul.f32 %v75, %v143
    %148 = vmax.xlane.f32.xlu0 %v52
    %v149 = vpop.xlane.xlu0 %148
    %150 = vmax.xlane.f32.xlu0 %v53
    %v151 = vpop.xlane.xlu0 %150
    %152 = vmax.xlane.f32.xlu0 %v54
    %v153 = vpop.xlane.xlu0 %152
    %154 = vmax.xlane.f32.xlu0 %v55
    %v155 = vpop.xlane.xlu0 %154
    %v156 = vsub.f32 %v52, %v149
    %v157 = vsub.f32 %v53, %v151
    %v158 = vsub.f32 %v54, %v153
    %v159 = vsub.f32 %v55, %v155
    %v160 = vmul.f32 %v156, 1.442695
    %v161 = vpow.pop %v160
    %v162 = vmul.f32 %v157, 1.442695
    %v163 = vpow.pop %v162
    %v164 = vmul.f32 %v158, 1.442695
    %v165 = vpow.pop %v164
    %v166 = vmul.f32 %v159, 1.442695
    %v167 = vpow.pop %v166
    %168 = vadd.xlane.f32.xlu0 %v161
    %v169 = vpop.xlane.xlu0 %168
    %170 = vadd.xlane.f32.xlu0 %v163
    %v171 = vpop.xlane.xlu0 %170
    %172 = vadd.xlane.f32.xlu0 %v165
    %v173 = vpop.xlane.xlu0 %172
    %174 = vadd.xlane.f32.xlu0 %v167
    %v175 = vpop.xlane.xlu0 %174
    %v176 = vrcp.pop %v169
    %v177 = vmul.f32 %v169, %v176
    %v178 = vsub.f32 1.0, %v177
    %v179 = vmul.f32 %v176, %v178
    %v180 = vadd.f32 %v176, %v179
    %vm181 = vweird.f32 %v169
    %vm182 = vweird.f32 %v176
    %vm183 = vmor %vm181, %vm182
    %v184 = vsel %vm183, %v176, %v180
    %v185 = vand.u32 2147483647, %v169
    %vm186 = vcmp.eq.f32.partialorder %v185, 8.507059e+37
    %v187 = vand.u32 %v169, 2147483648
    %v188 = vor.u32 1.1754944e-38, %v187
    %v189 = vsel %vm186, %v188, %v184
    %v190 = vmul.f32 1.0, %v189
    %v191 = vrcp.pop %v171
    %v192 = vmul.f32 %v171, %v191
    %v193 = vsub.f32 1.0, %v192
    %v194 = vmul.f32 %v191, %v193
    %v195 = vadd.f32 %v191, %v194
    %vm196 = vweird.f32 %v171
    %vm197 = vweird.f32 %v191
    %vm198 = vmor %vm196, %vm197
    %v199 = vsel %vm198, %v191, %v195
    %v200 = vand.u32 2147483647, %v171
    %vm201 = vcmp.eq.f32.partialorder %v200, 8.507059e+37
    %v202 = vand.u32 %v171, 2147483648
    %v203 = vor.u32 1.1754944e-38, %v202
    %v204 = vsel %vm201, %v203, %v199
    %v205 = vmul.f32 1.0, %v204
    %v206 = vrcp.pop %v173
    %v207 = vmul.f32 %v173, %v206
    %v208 = vsub.f32 1.0, %v207
    %v209 = vmul.f32 %v206, %v208
    %v210 = vadd.f32 %v206, %v209
    %vm211 = vweird.f32 %v173
    %vm212 = vweird.f32 %v206
    %vm213 = vmor %vm211, %vm212
    %v214 = vsel %vm213, %v206, %v210
    %v215 = vand.u32 2147483647, %v173
    %vm216 = vcmp.eq.f32.partialorder %v215, 8.507059e+37
    %v217 = vand.u32 %v173, 2147483648
    %v218 = vor.u32 1.1754944e-38, %v217
    %v219 = vsel %vm216, %v218, %v214
    %v220 = vmul.f32 1.0, %v219
    %v221 = vrcp.pop %v175
    %v222 = vmul.f32 %v175, %v221
    %v223 = vsub.f32 1.0, %v222
    %v224 = vmul.f32 %v221, %v223
    %v225 = vadd.f32 %v221, %v224
    %vm226 = vweird.f32 %v175
    %vm227 = vweird.f32 %v221
    %vm228 = vmor %vm226, %vm227
    %v229 = vsel %vm228, %v221, %v225
    %v230 = vand.u32 2147483647, %v175
    %vm231 = vcmp.eq.f32.partialorder %v230, 8.507059e+37
    %v232 = vand.u32 %v175, 2147483648
    %v233 = vor.u32 1.1754944e-38, %v232
    %v234 = vsel %vm231, %v233, %v229
    %v235 = vmul.f32 1.0, %v234
    %v236 = vmul.f32 %v161, %v190
    %v237 = vmul.f32 %v163, %v205
    %v238 = vmul.f32 %v165, %v220
    %v239 = vmul.f32 %v167, %v235
    %v240 = vsub.f32 %v144, %v236
    %v241 = vsub.f32 %v145, %v237
    %v242 = vsub.f32 %v146, %v238
    %v243 = vsub.f32 %v147, %v239
    %v244 = vmul.f32 %v240, %v240
    %v245 = vmul.f32 %v241, %v241
    %v246 = vmul.f32 %v242, %v242
    %v247 = vmul.f32 %v243, %v243
    %v248 = vld [vmem:[%s2] sm:$0xff]
    %v249 = vadd.f32 %v244, %v245
    %v250 = vadd.f32 %v249, %v246
    %v251 = vadd.f32 %v250, %v247
    %v252 = vadd.f32 %v248, %v251
    %253 = vst [vmem:[%s2] sm:$0xff] %v252
    // Predicated region
    $region22: #{consistent_loss.1} parent=1 // pred_check
      _
    $region23: #{consistent_loss.1} parent=1 // pred_check_branch
      %255 = sbr.rel (0) target = $region25
    $region24: #{consistent_loss.1} parent=1 // pred_region
      _
    $region25: #{consistent_loss.1} parent=1 // pred_fallthru
      _
    // Predicated region
    $region26: #{consistent_loss.1} parent=1 // pred_check
      _
    $region27: #{consistent_loss.1} parent=1 // pred_check_branch
      %257 = sbr.rel (0) target = $region29
    $region28: #{consistent_loss.1} parent=1 // pred_region
      _
    $region29: #{consistent_loss.1} parent=1 // pred_fallthru
      _
    %258 = vsyncpa [#allocation3], 1
    %259 = vsyncpa [#allocation5], 1

</llo_original>
